<compile_context>
chip_gen: v6e
topology: v6e:2x2x1
jax: 0.10.0
libtpu: 0.0.40
codegen_flags: <defaults>
</compile_context>

<pallas_src>
import jax
import jax.numpy as jnp
from jax.experimental import pallas as pl
from jax.experimental.pallas import tpu as pltpu

# Deterministic "weight" of the linear layer (the module hard-codes 2).
LINEAR_WEIGHT = 2.0

_LANES = 128          # lane-dense last dim (vreg lane width)
_MAX_ROW_TILE = 4096  # rows per grid step; 4096*128*4 B = 2 MiB per f32 buffer


def _hardsig_kernel(x_ref, o_ref):
    # Compute in f32 regardless of storage dtype; kernel is HBM-bound so the
    # cast is free, and it keeps v5e (no bf16 VPU) on a safe path.
    x = x_ref[...].astype(jnp.float32)
    y = x * LINEAR_WEIGHT + 3.0          # linear(weight=2) + 3
    y = jnp.maximum(y, 0.0)              # clamp_min(., 0)
    y = jnp.minimum(y, 6.0)              # clamp_max(., 6)
    o_ref[...] = (y * (1.0 / 6.0)).astype(o_ref.dtype)   # / 6


def model_forward(x1: jax.Array) -> jax.Array:
    """Replicates Model.forward. Returns shape (N, 1) in x1's dtype."""
    n = x1.size
    out_dtype = x1.dtype
    flat = x1.reshape(-1)

    # Lane-dense slab: (rows, 128). Pad only up to the next multiple of 128
    # lanes; this pad (a full extra HBM pass) is skipped when N % 128 == 0.
    n_padded = pl.cdiv(n, _LANES) * _LANES
    padded = n_padded != n
    if padded:
        flat = jnp.pad(flat, (0, n_padded - n))
    rows = n_padded // _LANES
    slab = flat.reshape(rows, _LANES)

    if rows <= _MAX_ROW_TILE:
        # Single block equal to the full array dims (valid even if rows % 8 != 0).
        row_tile = rows
    else:
        # Multiple-of-8 row tile; Pallas masks the ragged last block.
        row_tile = _MAX_ROW_TILE
    grid = (pl.cdiv(rows, row_tile),)

    out_slab = pl.pallas_call(
        _hardsig_kernel,
        out_shape=jax.ShapeDtypeStruct((rows, _LANES), out_dtype),
        grid=grid,
        in_specs=[pl.BlockSpec((row_tile, _LANES), lambda i: (i, 0))],
        out_specs=pl.BlockSpec((row_tile, _LANES), lambda i: (i, 0)),
        compiler_params=pltpu.CompilerParams(
            dimension_semantics=("parallel",)),
    )(slab)

    # Glue: drop padding only if it was added, then (N,) -> (N, 1).
    out_flat = out_slab.reshape(-1)
    if padded:
        out_flat = out_flat[:n]
    return out_flat.reshape(-1, 1)


if __name__ == "__main__":
    key = jax.random.PRNGKey(0)
    # Same shape as the module's example input: (1, 100, 100)
    x1 = jax.random.normal(key, (1, 100, 100), dtype=jnp.float32)

    out = jax.block_until_ready(model_forward(x1))

    # Reference check in plain JAX (mirrors the PyTorch graph exactly).
    ref = jnp.clip(x1.reshape(-1, 1) * LINEAR_WEIGHT + 3.0, 0.0, 6.0) / 6.0
    assert out.shape == (100 * 100, 1), out.shape
    assert out.dtype == x1.dtype, out.dtype
    assert jnp.allclose(out, ref, atol=1e-6), "mismatch vs reference"

    print("KERNEL_OK")
</pallas_src>

<mosaic_0001>
module attributes {stable_mosaic.version = 11 : i64} {
  func.func @_hardsig_kernel(%arg0: i32, %arg1: memref<79x128xf32, #tpu.memory_space<vmem>>, %arg2: memref<79x128xf32, #tpu.memory_space<vmem>>) attributes {dimension_semantics = [#tpu.dimension_semantics<parallel>], iteration_bounds = array<i64: 1>, scalar_prefetch = 0 : i64, scratch_operands = 0 : i64, tpu.core_type = #tpu.core_type<tc>, window_params = [{transform_indices = @transform_0, window_bounds = array<i64: 79, 128>}, {transform_indices = @transform_1, window_bounds = array<i64: 79, 128>}]} {
    %c0 = arith.constant 0 : index
    %c0_0 = arith.constant 0 : index
    %0 = vector.load %arg1[%c0, %c0_0] : memref<79x128xf32, #tpu.memory_space<vmem>>, vector<79x128xf32>
    %cst = arith.constant 2.000000e+00 : f32
    %1 = vector.broadcast %cst : f32 to vector<79x128xf32>
    %2 = arith.mulf %0, %1 : vector<79x128xf32>
    %cst_1 = arith.constant 3.000000e+00 : f32
    %3 = vector.broadcast %cst_1 : f32 to vector<79x128xf32>
    %4 = arith.addf %2, %3 : vector<79x128xf32>
    %cst_2 = arith.constant 0.000000e+00 : f32
    %5 = vector.broadcast %cst_2 : f32 to vector<79x128xf32>
    %6 = arith.maximumf %4, %5 : vector<79x128xf32>
    %cst_3 = arith.constant 6.000000e+00 : f32
    %7 = vector.broadcast %cst_3 : f32 to vector<79x128xf32>
    %8 = arith.minimumf %6, %7 : vector<79x128xf32>
    %cst_4 = arith.constant 0.166666672 : f32
    %9 = vector.broadcast %cst_4 : f32 to vector<79x128xf32>
    %10 = arith.mulf %8, %9 : vector<79x128xf32>
    %c0_5 = arith.constant 0 : index
    %c0_6 = arith.constant 0 : index
    %11 = vector.load %arg2[%c0_5, %c0_6] : memref<79x128xf32, #tpu.memory_space<vmem>>, vector<79x128xf32>
    tpu.vector_store %arg2[%c0_5, %c0_6], %10 {strides = array<i32>} : memref<79x128xf32, #tpu.memory_space<vmem>>, vector<79x128xf32>,
    return
  }
  func.func @transform_0(%arg0: i32) -> (i32, i32) {
    %c0_i32 = arith.constant 0 : i32
    %c0_i32_0 = arith.constant 0 : i32
    return %arg0, %c0_i32 : i32, i32
  }
  func.func @transform_1(%arg0: i32) -> (i32, i32) {
    %c0_i32 = arith.constant 0 : i32
    %c0_i32_0 = arith.constant 0 : i32
    return %arg0, %c0_i32 : i32, i32
  }
}

</mosaic_0001>

<llo_original>
// kernel: tpu_custom_call.1
$region0: #{tpu_custom_call.1}
  #allocation0 [shape = 'u32[]', space=smem, size = 0x4, offset = 0x4, fixed_abs, tag = 'smem constant byte address 0x4 - core index']
  #allocation1 [shape = 'u32[144,128]{1,0:T(1,128)}', space=vmem, size = 0x12000, scoped, tag = 'internal scratch']
  %s0 = inlined_call_operand.hbm [shape: f32[79,128], index: 0, kind: input, shape index: {}]
  %s1 = inlined_call_operand.hbm [shape: f32[79,128], index: 1, kind: output, shape index: {}]
  %s2 = sld [smem:[#allocation0]]
  $region18: #{tpu_custom_call.1} parent=0
    _
  %s4 = ssub.s32 1, %s2
  %s5 = scalar_select 0, %s4, %s2
  $region1: #{tpu_custom_call.1} parent=0
    #allocation2 [shape = 'u8[40960]{0}', space=vmem, size = 0xa000, scoped, tag = 'input window, operand 0, single buffered']
    #allocation3 [shape = 's32[1]{0}', space=sflag, size = 0x4, scoped, tag = 'scoped memory for tpu_custom_call.1']
    #allocation4 [shape = 's32[1]{0}', space=sflag, size = 0x4, scoped, tag = 'scoped memory for tpu_custom_call.1']
    #allocation5 [shape = 'u8[40960]{0}', space=vmem, size = 0xa000, scoped, tag = 'output window, operand 0, single buffered']
    %6 = vsyncpa [#allocation3], 0
    %7 = vsyncpa [#allocation4], 0
    // Predicated region
    $region2: #{tpu_custom_call.1} parent=1 // pred_check
      _
    $region3: #{tpu_custom_call.1} parent=1 // pred_check_branch
      %9 = sbr.rel (0) target = $region5
    $region4: #{tpu_custom_call.1} parent=1 // pred_region
      %s11 = ssub.s32 1280, 1280
      %12 = vsyncadd [#allocation3], %s11
      %s13 = sshll.u32 [#allocation2], 4
      %s14 = int_to_ptr.vmem [resolvable:$true] %s13
      %19 = dma.hbm_to_vmem [thread:$0]  %s0, 1280, %s14, [#allocation3], 128, 128, 8
    $region5: #{tpu_custom_call.1} parent=1 // pred_fallthru
      _
    // Predicated region
    $region6: #{tpu_custom_call.1} parent=1 // pred_check
      _
    $region7: #{tpu_custom_call.1} parent=1 // pred_check_branch
      %21 = sbr.rel (0) target = $region9
    $region8: #{tpu_custom_call.1} parent=1 // pred_region
      %22 = dma.done [#allocation3], 1280
    $region9: #{tpu_custom_call.1} parent=1 // pred_fallthru
      _
    %v23 = vld [vmem:[#allocation2] sm:$0xff]
    %v24 = vld [vmem:[#allocation2 + $0x8] sm:$0xff]
    %v25 = vld [vmem:[#allocation2 + $0x10] sm:$0xff]
    %v26 = vld [vmem:[#allocation2 + $0x18] sm:$0xff]
    %v27 = vld [vmem:[#allocation2 + $0x20] sm:$0xff]
    %v28 = vld [vmem:[#allocation2 + $0x28] sm:$0xff]
    %v29 = vld [vmem:[#allocation2 + $0x30] sm:$0xff]
    %v30 = vld [vmem:[#allocation2 + $0x38] sm:$0xff]
    %v31 = vld [vmem:[#allocation2 + $0x40] sm:$0xff]
    %v32 = vld [vmem:[#allocation2 + $0x48] sm:$0x7f]
    %v33 = vmul.f32 %v23, 2.0
    %v34 = vmul.f32 %v24, 2.0
    %v35 = vmul.f32 %v25, 2.0
    %v36 = vmul.f32 %v26, 2.0
    %v37 = vmul.f32 %v27, 2.0
    %v38 = vmul.f32 %v28, 2.0
    %v39 = vmul.f32 %v29, 2.0
    %v40 = vmul.f32 %v30, 2.0
    %v41 = vmul.f32 %v31, 2.0
    %v42 = vmul.f32 %v32, 2.0
    %v43 = vadd.f32 %v33, 3.0
    %v44 = vadd.f32 %v34, 3.0
    %v45 = vadd.f32 %v35, 3.0
    %v46 = vadd.f32 %v36, 3.0
    %v47 = vadd.f32 %v37, 3.0
    %v48 = vadd.f32 %v38, 3.0
    %v49 = vadd.f32 %v39, 3.0
    %v50 = vadd.f32 %v40, 3.0
    %v51 = vadd.f32 %v41, 3.0
    %v52 = vadd.f32 %v42, 3.0
    %v53 = vmax.f32 %v43, 0.0
    %v54 = vmax.f32 %v44, 0.0
    %v55 = vmax.f32 %v45, 0.0
    %v56 = vmax.f32 %v46, 0.0
    %v57 = vmax.f32 %v47, 0.0
    %v58 = vmax.f32 %v48, 0.0
    %v59 = vmax.f32 %v49, 0.0
    %v60 = vmax.f32 %v50, 0.0
    %v61 = vmax.f32 %v51, 0.0
    %v62 = vmax.f32 %v52, 0.0
    %v63 = vmin.f32 %v53, 6.0
    %v64 = vmin.f32 %v54, 6.0
    %v65 = vmin.f32 %v55, 6.0
    %v66 = vmin.f32 %v56, 6.0
    %v67 = vmin.f32 %v57, 6.0
    %v68 = vmin.f32 %v58, 6.0
    %v69 = vmin.f32 %v59, 6.0
    %v70 = vmin.f32 %v60, 6.0
    %v71 = vmin.f32 %v61, 6.0
    %v72 = vmin.f32 %v62, 6.0
    %v73 = vmul.f32 %v63, 0.16666667
    %v74 = vmul.f32 %v64, 0.16666667
    %v75 = vmul.f32 %v65, 0.16666667
    %v76 = vmul.f32 %v66, 0.16666667
    %v77 = vmul.f32 %v67, 0.16666667
    %v78 = vmul.f32 %v68, 0.16666667
    %v79 = vmul.f32 %v69, 0.16666667
    %v80 = vmul.f32 %v70, 0.16666667
    %v81 = vmul.f32 %v71, 0.16666667
    %v82 = vmul.f32 %v72, 0.16666667
    %83 = vst [vmem:[#allocation5] sm:$0xff] %v73
    %84 = vst [vmem:[#allocation5 + $0x8] sm:$0xff] %v74
    %85 = vst [vmem:[#allocation5 + $0x10] sm:$0xff] %v75
    %86 = vst [vmem:[#allocation5 + $0x18] sm:$0xff] %v76
    %87 = vst [vmem:[#allocation5 + $0x20] sm:$0xff] %v77
    %88 = vst [vmem:[#allocation5 + $0x28] sm:$0xff] %v78
    %89 = vst [vmem:[#allocation5 + $0x30] sm:$0xff] %v79
    %90 = vst [vmem:[#allocation5 + $0x38] sm:$0xff] %v80
    %91 = vst [vmem:[#allocation5 + $0x40] sm:$0xff] %v81
    %92 = vst [vmem:[#allocation5 + $0x48] sm:$0x7f] %v82
    // Predicated region
    $region10: #{tpu_custom_call.1} parent=1 // pred_check
      _
    $region11: #{tpu_custom_call.1} parent=1 // pred_check_branch
      %94 = sbr.rel (0) target = $region13
    $region12: #{tpu_custom_call.1} parent=1 // pred_region
      %s96 = ssub.s32 1280, 1280
      %97 = vsyncadd [#allocation4], %s96
      %s98 = sshll.u32 [#allocation5], 4
      %s99 = int_to_ptr.vmem [resolvable:$true] %s98
      %104 = dma.vmem_to_hbm [thread:$0]  %s99, 1280, %s1, [#allocation4], 128, 128, 8
    $region13: #{tpu_custom_call.1} parent=1 // pred_fallthru
      _
    // Predicated region
    $region14: #{tpu_custom_call.1} parent=1 // pred_check
      _
    $region15: #{tpu_custom_call.1} parent=1 // pred_check_branch
      %106 = sbr.rel (0) target = $region17
    $region16: #{tpu_custom_call.1} parent=1 // pred_region
      %107 = dma.done [#allocation4], 1280
    $region17: #{tpu_custom_call.1} parent=1 // pred_fallthru
      _
    %108 = vsyncpa [#allocation3], 1
    %109 = vsyncpa [#allocation4], 1

</llo_original>
